<compile_context>
chip_gen: v7x
topology: tpu7x:2x2x1
jax: 0.10.0
libtpu: 0.0.40
codegen_flags: <defaults>
</compile_context>

<pallas_src>
import jax
import jax.numpy as jnp
from jax.experimental import pallas as pl
from jax.experimental.pallas import tpu as pltpu


_VMEM_LIMIT_BYTES = 48 * 1024 * 1024  # safe on v5e/v6e (128 MiB) and v7x (64 MiB)


# --------------------------------------------------------------------------- #
# Kernels
# --------------------------------------------------------------------------- #
def _matmul_single_block_kernel(x_ref, w_ref, o_ref):
    # Whole problem fits in one tile: plain MXU matmul, no reduction loop.
    o_ref[...] = jnp.dot(
        x_ref[...], w_ref[...], preferred_element_type=jnp.float32
    ).astype(o_ref.dtype)


def _matmul_kernel_f32_out(x_ref, w_ref, o_ref):
    # f32 output: accumulate directly into the resident output block (no scratch).
    @pl.when(pl.program_id(2) == 0)
    def _init():
        o_ref[...] = jnp.zeros_like(o_ref)

    o_ref[...] += jnp.dot(
        x_ref[...], w_ref[...], preferred_element_type=jnp.float32
    )


def _matmul_kernel_acc(x_ref, w_ref, o_ref, acc_ref):
    # Low-precision output: accumulate in an f32 VMEM scratch, cast at the end.
    @pl.when(pl.program_id(2) == 0)
    def _init():
        acc_ref[...] = jnp.zeros_like(acc_ref)

    acc_ref[...] += jnp.dot(
        x_ref[...], w_ref[...], preferred_element_type=jnp.float32
    )

    @pl.when(pl.program_id(2) == pl.num_programs(2) - 1)
    def _store():
        o_ref[...] = acc_ref[...].astype(o_ref.dtype)


# --------------------------------------------------------------------------- #
# Tiling helpers
# --------------------------------------------------------------------------- #
def _round_up(x, m):
    return ((x + m - 1) // m) * m


def _sublane_multiple(dtype):
    # 8 for 4-byte dtypes, 16 for bf16/fp16, 32 for int8/fp8.
    itemsize = jnp.dtype(dtype).itemsize
    return max(8, 32 // itemsize)


def _largest_divisor_tile(extent, granule, cap):
    """Largest tile <= cap that is a multiple of `granule` and divides `extent`."""
    n = extent // granule
    max_d = max(1, cap // granule)
    best = 1
    for d in range(1, min(n, max_d) + 1):
        if n % d == 0:
            best = d
    return best * granule


def _choose_tiles(Bp, Kp, Np, sub):
    # Caps: output tile <=256x512, K strip <=1024.  Double-buffered f32 working
    # set at the caps is ~7.5 MiB -> comfortably under every generation's budget.
    tm = _largest_divisor_tile(Bp, sub, 256)
    tn = _largest_divisor_tile(Np, 128, 512)
    tk = _largest_divisor_tile(Kp, 128, 1024)
    # v7x has 2 TensorCores: make sure the parallel grid has >=2 blocks when the
    # N extent allows it (negligible cost on single-TC v5e/v6e).
    if (Bp // tm) * (Np // tn) < 2 and Np // 128 >= 2:
        tn_small = _largest_divisor_tile(Np, 128, max(128, tn // 2))
        if Np // tn_small >= 2:
            tn = tn_small
    return tm, tn, tk


# --------------------------------------------------------------------------- #
# Pallas linear
# --------------------------------------------------------------------------- #
def _linear_pallas(x, w_t):
    """x: (B, K) padded-on-the-fly; w_t: (Kp, Np) pre-laid-out weight."""
    B, K = x.shape
    Kp, Np = w_t.shape
    out_dtype = jnp.result_type(x.dtype, w_t.dtype)

    sub = _sublane_multiple(x.dtype)
    Bp = _round_up(B, sub)
    if (Bp, Kp) != (B, K):
        x = jnp.pad(x, ((0, Bp - B), (0, Kp - K)))

    tm, tn, tk = _choose_tiles(Bp, Kp, Np, sub)
    grid = (Bp // tm, Np // tn, Kp // tk)

    # Fast path: whole problem is one tile -> no reduction scaffolding at all.
    if grid == (1, 1, 1):
        return pl.pallas_call(
            _matmul_single_block_kernel,
            out_shape=jax.ShapeDtypeStruct((Bp, Np), out_dtype),
            in_specs=[
                pl.BlockSpec((Bp, Kp), lambda: (0, 0)),
                pl.BlockSpec((Kp, Np), lambda: (0, 0)),
            ],
            out_specs=pl.BlockSpec((Bp, Np), lambda: (0, 0)),
            compiler_params=pltpu.CompilerParams(
                vmem_limit_bytes=_VMEM_LIMIT_BYTES
            ),
        )(x, w_t)

    if out_dtype == jnp.float32:
        kernel = _matmul_kernel_f32_out
        scratch_shapes = []
    else:
        kernel = _matmul_kernel_acc
        scratch_shapes = [pltpu.VMEM((tm, tn), jnp.float32)]

    return pl.pallas_call(
        kernel,
        out_shape=jax.ShapeDtypeStruct((Bp, Np), out_dtype),
        grid_spec=pltpu.PrefetchScalarGridSpec(
            num_scalar_prefetch=0,
            grid=grid,
            in_specs=[
                pl.BlockSpec((tm, tk), lambda i, j, k: (i, k)),  # x tile
                pl.BlockSpec((tk, tn), lambda i, j, k: (k, j)),  # W^T tile
            ],
            out_specs=pl.BlockSpec((tm, tn), lambda i, j, k: (i, j)),
            scratch_shapes=scratch_shapes,
        ),
        compiler_params=pltpu.CompilerParams(
            dimension_semantics=("parallel", "parallel", "arbitrary"),
            vmem_limit_bytes=_VMEM_LIMIT_BYTES,
        ),
    )(x, w_t)


class PallasLinear:
    """Equivalent of the torch Model: y = x @ W^T, bias=False.

    The weight is transposed to (K, N) and padded to the (sublane, 128) layout
    minimum ONCE here, so the per-call path never re-reads or re-lays-out W.
    """

    def __init__(self, weight, compute_dtype=None):
        weight = jnp.asarray(weight)
        if compute_dtype is not None:
            # Optional bf16 compute path (v6e/v7x); default keeps f32 semantics.
            weight = weight.astype(compute_dtype)
        self.out_features, self.in_features = weight.shape
        K, N = self.in_features, self.out_features
        self.Kp = _round_up(K, 128)  # K is x's lane dim AND w_t's sublane dim
        self.Np = _round_up(N, 128)  # lane-dense output
        w_t = weight.T  # (K, N)
        if (self.Kp, self.Np) != (K, N):
            w_t = jnp.pad(w_t, ((0, self.Kp - K), (0, self.Np - N)))
        self.w_t = w_t
        self.compute_dtype = compute_dtype

    def __call__(self, x):
        x = jnp.asarray(x)
        if self.compute_dtype is not None:
            x = x.astype(self.compute_dtype)
        squeeze = x.ndim == 1
        if squeeze:
            x = x[None, :]
        B, K = x.shape
        assert K == self.in_features, f"in_features mismatch: {K} vs {self.in_features}"
        out = _linear_pallas(x, self.w_t)
        out = out[:B, : self.out_features]
        if squeeze:
            out = out[0]
        return out


# --------------------------------------------------------------------------- #
# Demo / correctness checks
# --------------------------------------------------------------------------- #
if __name__ == "__main__":
    in_features = 32
    out_features = 16
    batch = 8

    key = jax.random.PRNGKey(0)
    kx, kw, kx1, kx2, kw2, kx3, kw3 = jax.random.split(key, 7)

    # "Custom weights" supplied at module init (torch copies them into nn.Linear).
    weight = jax.random.normal(kw, (out_features, in_features), dtype=jnp.float32)
    model = PallasLinear(weight)  # weight layout prep happens once, here

    # 2-D batched input (dynamic-batch usage) — tiny single-tile fast path.
    x = jax.random.normal(kx, (batch, in_features), dtype=jnp.float32)
    y = model(x)
    jax.block_until_ready(y)
    assert y.shape == (batch, out_features)
    assert jnp.allclose(y, x @ weight.T, atol=1e-5, rtol=1e-5)

    # 1-D input of shape (in_features,), as in the module docstring.
    x1 = jax.random.normal(kx1, (in_features,), dtype=jnp.float32)
    y1 = model(x1)
    jax.block_until_ready(y1)
    assert y1.shape == (out_features,)
    assert jnp.allclose(y1, x1 @ weight.T, atol=1e-5, rtol=1e-5)

    # Non-aligned shapes: exercises layout-minimum padding + multi-N-block grid.
    B2, K2, N2 = 20, 200, 300
    x2 = jax.random.normal(kx2, (B2, K2), dtype=jnp.float32)
    w2 = jax.random.normal(kw2, (N2, K2), dtype=jnp.float32)
    m2 = PallasLinear(w2)
    y2 = m2(x2)
    jax.block_until_ready(y2)
    assert y2.shape == (B2, N2)
    assert jnp.allclose(y2, x2 @ w2.T, atol=1e-4, rtol=1e-4)

    # Larger K: exercises the multi-step K reduction with direct f32 accumulation.
    B3, K3, N3 = 16, 2304, 512
    x3 = jax.random.normal(kx3, (B3, K3), dtype=jnp.float32)
    w3 = jax.random.normal(kw3, (N3, K3), dtype=jnp.float32)
    m3 = PallasLinear(w3)
    y3 = m3(x3)
    jax.block_until_ready(y3)
    assert y3.shape == (B3, N3)
    assert jnp.allclose(y3, x3 @ w3.T, atol=1e-3, rtol=1e-3)

    print("KERNEL_OK")
</pallas_src>

<mosaic_0001>
module attributes {stable_mosaic.version = 11 : i64} {
  func.func @_matmul_single_block_kernel(%arg0: memref<8x128xf32, #tpu.memory_space<vmem>>, %arg1: memref<128x128xf32, #tpu.memory_space<vmem>>, %arg2: memref<8x128xf32, #tpu.memory_space<vmem>>) attributes {dimension_semantics = [], scalar_prefetch = 0 : i64, scratch_operands = 0 : i64, tpu.core_type = #tpu.core_type<tc>} {
    %c0 = arith.constant 0 : index
    %c0_0 = arith.constant 0 : index
    %0 = vector.load %arg0[%c0, %c0_0] : memref<8x128xf32, #tpu.memory_space<vmem>>, vector<8x128xf32>
    %c0_1 = arith.constant 0 : index
    %c0_2 = arith.constant 0 : index
    %1 = vector.load %arg1[%c0_1, %c0_2] : memref<128x128xf32, #tpu.memory_space<vmem>>, vector<128x128xf32>
    %cst = arith.constant dense<0.000000e+00> : vector<8x128xf32>
    %2 = tpu.matmul %0, %1, %cst {dimension_numbers = #tpu.dot_dimension_numbers<[1], [0], [0], [1], [0, 0, 1, 1], [], []>} : vector<8x128xf32>, vector<128x128xf32>, vector<8x128xf32> -> vector<8x128xf32>
    %c0_3 = arith.constant 0 : index
    %c0_4 = arith.constant 0 : index
    %3 = vector.load %arg2[%c0_3, %c0_4] : memref<8x128xf32, #tpu.memory_space<vmem>>, vector<8x128xf32>
    tpu.vector_store %arg2[%c0_3, %c0_4], %2 {strides = array<i32>} : memref<8x128xf32, #tpu.memory_space<vmem>>, vector<8x128xf32>,
    return
  }
}

</mosaic_0001>

<llo_original>
// kernel: tpu_custom_call.1
$region0: #{tpu_custom_call.1}
  #allocation0 [shape = 'u32[]', space=smem, size = 0x4, offset = 0x4, fixed_abs, tag = 'smem constant byte address 0x4 - core index']
  #allocation1 [shape = 'u32[144,128]{1,0:T(1,128)}', space=vmem, size = 0x12000, scoped, tag = 'internal scratch']
  %s0 = inlined_call_operand.hbm [shape: f32[8,128], index: 0, kind: input, shape index: {}]
  %s1 = inlined_call_operand.hbm [shape: f32[128,128], index: 1, kind: input, shape index: {}]
  %s2 = inlined_call_operand.hbm [shape: f32[8,128], index: 2, kind: output, shape index: {}]
  %s3 = sld [smem:[#allocation0]]
  $region26: #{tpu_custom_call.1} parent=0
    _
  %s5 = ssub.s32 1, %s3
  %s6 = scalar_select 0, %s5, %s3
  $region1: #{tpu_custom_call.1} parent=0
    #allocation2 [shape = 'u8[4096]{0}', space=vmem, size = 0x1000, scoped, tag = 'input window, operand 0, single buffered']
    #allocation3 [shape = 's32[1]{0}', space=sflag, size = 0x4, scoped, tag = 'scoped memory for tpu_custom_call.1']
    #allocation4 [shape = 's32[1]{0}', space=sflag, size = 0x4, scoped, tag = 'scoped memory for tpu_custom_call.1']
    #allocation5 [shape = 'u8[65536]{0}', space=vmem, size = 0x10000, scoped, tag = 'input window, operand 1, single buffered']
    #allocation6 [shape = 's32[1]{0}', space=sflag, size = 0x4, scoped, tag = 'scoped memory for tpu_custom_call.1']
    #allocation7 [shape = 'u8[4096]{0}', space=vmem, size = 0x1000, scoped, tag = 'output window, operand 0, single buffered']
    %7 = vsyncpa [#allocation3], 0
    %8 = vsyncpa [#allocation6], 0
    %9 = vsyncpa [#allocation4], 0
    // Predicated region
    $region2: #{tpu_custom_call.1} parent=1 // pred_check
      _
    $region3: #{tpu_custom_call.1} parent=1 // pred_check_branch
      %11 = sbr.rel (0) target = $region5
    $region4: #{tpu_custom_call.1} parent=1 // pred_region
      %s13 = ssub.s32 128, 128
      %14 = vsyncadd [#allocation3], %s13
      %s16 = sshll.u32 [#allocation2], 4
      %s17 = int_to_ptr.vmem [resolvable:$true] %s16
      %19 = dma.hbm_to_vmem [thread:$0]  %s0, 128, %s17, [#allocation3]
    $region5: #{tpu_custom_call.1} parent=1 // pred_fallthru
      _
    // Predicated region
    $region6: #{tpu_custom_call.1} parent=1 // pred_check
      _
    $region7: #{tpu_custom_call.1} parent=1 // pred_check_branch
      %21 = sbr.rel (0) target = $region9
    $region8: #{tpu_custom_call.1} parent=1 // pred_region
      %s23 = ssub.s32 2048, 2048
      %24 = vsyncadd [#allocation6], %s23
      %s25 = sshll.u32 [#allocation5], 4
      %s26 = int_to_ptr.vmem [resolvable:$true] %s25
      %31 = dma.hbm_to_vmem [thread:$0]  %s1, 2048, %s26, [#allocation6], 128, 128, 8
    $region9: #{tpu_custom_call.1} parent=1 // pred_fallthru
      _
    // Predicated region
    $region10: #{tpu_custom_call.1} parent=1 // pred_check
      _
    $region11: #{tpu_custom_call.1} parent=1 // pred_check_branch
      %33 = sbr.rel (0) target = $region13
    $region12: #{tpu_custom_call.1} parent=1 // pred_region
      %34 = dma.done [#allocation3], 128
    $region13: #{tpu_custom_call.1} parent=1 // pred_fallthru
      _
    // Predicated region
    $region14: #{tpu_custom_call.1} parent=1 // pred_check
      _
    $region15: #{tpu_custom_call.1} parent=1 // pred_check_branch
      %36 = sbr.rel (0) target = $region17
    $region16: #{tpu_custom_call.1} parent=1 // pred_region
      %37 = dma.done [#allocation6], 2048
    $region17: #{tpu_custom_call.1} parent=1 // pred_fallthru
      _
    %v38 = vld [vmem:[#allocation2] sm:$0xff]
    %v39 = vld [vmem:[#allocation5] sm:$0xff]
    %v40 = vld [vmem:[#allocation5 + $0x8] sm:$0xff]
    %v41 = vld [vmem:[#allocation5 + $0x10] sm:$0xff]
    %v42 = vld [vmem:[#allocation5 + $0x18] sm:$0xff]
    %v43 = vld [vmem:[#allocation5 + $0x20] sm:$0xff]
    %v44 = vld [vmem:[#allocation5 + $0x28] sm:$0xff]
    %v45 = vld [vmem:[#allocation5 + $0x30] sm:$0xff]
    %v46 = vld [vmem:[#allocation5 + $0x38] sm:$0xff]
    %v47 = vld [vmem:[#allocation5 + $0x40] sm:$0xff]
    %v48 = vld [vmem:[#allocation5 + $0x48] sm:$0xff]
    %v49 = vld [vmem:[#allocation5 + $0x50] sm:$0xff]
    %v50 = vld [vmem:[#allocation5 + $0x58] sm:$0xff]
    %v51 = vld [vmem:[#allocation5 + $0x60] sm:$0xff]
    %v52 = vld [vmem:[#allocation5 + $0x68] sm:$0xff]
    %v53 = vld [vmem:[#allocation5 + $0x70] sm:$0xff]
    %v54 = vld [vmem:[#allocation5 + $0x78] sm:$0xff]
    %55 = vmatprep.subr.mxu0 0.0
    %56 = vmatpush1.msra.mxu0 %v39
    %57 = vmatprep.subr.mxu0 0.0
    %58 = vmatpush1.msra.mxu0 %v40
    %59 = vmatprep.subr.mxu0 0.0
    %60 = vmatpush1.msra.mxu0 %v41
    %61 = vmatprep.subr.mxu0 0.0
    %62 = vmatpush1.msra.mxu0 %v42
    %63 = vmatprep.subr.mxu0 0.0
    %64 = vmatpush1.msra.mxu0 %v43
    %65 = vmatprep.subr.mxu0 0.0
    %66 = vmatpush1.msra.mxu0 %v44
    %67 = vmatprep.subr.mxu0 0.0
    %68 = vmatpush1.msra.mxu0 %v45
    %69 = vmatprep.subr.mxu0 0.0
    %70 = vmatpush1.msra.mxu0 %v46
    %71 = vmatprep.subr.mxu0 0.0
    %72 = vmatpush1.msra.mxu0 %v47
    %73 = vmatprep.subr.mxu0 0.0
    %74 = vmatpush1.msra.mxu0 %v48
    %75 = vmatprep.subr.mxu0 0.0
    %76 = vmatpush1.msra.mxu0 %v49
    %77 = vmatprep.subr.mxu0 0.0
    %78 = vmatpush1.msra.mxu0 %v50
    %79 = vmatprep.subr.mxu0 0.0
    %80 = vmatpush1.msra.mxu0 %v51
    %81 = vmatprep.subr.mxu0 0.0
    %82 = vmatpush1.msra.mxu0 %v52
    %83 = vmatprep.subr.mxu0 0.0
    %84 = vmatpush1.msra.mxu0 %v53
    %85 = vmatprep.subr.mxu0 0.0
    %86 = vmatpush1.msra.mxu0 %v54
    %87 = vmatprep.subr.mxu0 0.0
    %88 = vmatpush1.msra.mxu0 0.0
    %89 = vmatprep.subr.mxu0 0.0
    %90 = vmatpush1.msra.mxu0 0.0
    %91 = vmatprep.subr.mxu0 0.0
    %92 = vmatpush1.msra.mxu0 0.0
    %93 = vmatprep.subr.mxu0 0.0
    %94 = vmatpush1.msra.mxu0 0.0
    %95 = vmatprep.subr.mxu0 0.0
    %96 = vmatpush1.msra.mxu0 0.0
    %97 = vmatprep.subr.mxu0 0.0
    %98 = vmatpush1.msra.mxu0 0.0
    %99 = vmatprep.subr.mxu0 0.0
    %100 = vmatpush1.msra.mxu0 0.0
    %101 = vmatprep.subr.mxu0 0.0
    %102 = vmatpush1.msra.mxu0 0.0
    %103 = vmatprep.subr.mxu0 0.0
    %104 = vmatpush1.msra.mxu0 0.0
    %105 = vmatprep.subr.mxu0 0.0
    %106 = vmatpush1.msra.mxu0 0.0
    %107 = vmatprep.subr.mxu0 0.0
    %108 = vmatpush1.msra.mxu0 0.0
    %109 = vmatprep.subr.mxu0 0.0
    %110 = vmatpush1.msra.mxu0 0.0
    %111 = vmatprep.subr.mxu0 0.0
    %112 = vmatpush1.msra.mxu0 0.0
    %113 = vmatprep.subr.mxu0 0.0
    %114 = vmatpush1.msra.mxu0 0.0
    %115 = vmatprep.subr.mxu0 0.0
    %116 = vmatpush1.msra.mxu0 0.0
    %117 = vmatprep.subr.mxu0 0.0
    %118 = vmatpush1.msra.mxu0 0.0
    %119 = vmatprep.mubr.f32.mxu0 0.0
    %120 = vmatmul.mubr.f32.gmra.mrb[0].mxu0 %v38
    %v121 = vpop.f32.mrb[0].mxu0
    %v122 = vadd.f32 0.0, %v121
    %v123 = vpop.f32.mrb[0].mxu0
    %124 = vdwg.mxu0
    %125 = vst [vmem:[#allocation7] sm:$0xff] %v122
    // Predicated region
    $region18: #{tpu_custom_call.1} parent=1 // pred_check
      _
    $region19: #{tpu_custom_call.1} parent=1 // pred_check_branch
      %127 = sbr.rel (0) target = $region21
    $region20: #{tpu_custom_call.1} parent=1 // pred_region
      %s129 = ssub.s32 128, 128
      %130 = vsyncadd [#allocation4], %s129
      %s132 = sshll.u32 [#allocation7], 4
      %s133 = int_to_ptr.vmem [resolvable:$true] %s132
      %135 = dma.vmem_to_hbm [thread:$0]  %s133, 128, %s2, [#allocation4]
    $region21: #{tpu_custom_call.1} parent=1 // pred_fallthru
      _
    // Predicated region
    $region22: #{tpu_custom_call.1} parent=1 // pred_check
      _
    $region23: #{tpu_custom_call.1} parent=1 // pred_check_branch
      %137 = sbr.rel (0) target = $region25
    $region24: #{tpu_custom_call.1} parent=1 // pred_region
      %138 = dma.done [#allocation4], 128
    $region25: #{tpu_custom_call.1} parent=1 // pred_fallthru
      _
    %139 = vsyncpa [#allocation3], 1
    %140 = vsyncpa [#allocation6], 1
    %141 = vsyncpa [#allocation4], 1

</llo_original>
